<compile_context>
chip_gen: v7x
topology: tpu7x:2x2x1
jax: 0.10.0
libtpu: 0.0.40
codegen_flags: <defaults>
</compile_context>

<pallas_src>
import jax
import jax.numpy as jnp
from jax import lax
from jax.experimental import pallas as pl
from jax.experimental.pallas import tpu as pltpu

LANES = 128      # lane width: linear weight / bias / output padded to this
SUBLANES = 8     # sublane granularity for the output slab


def _round_up(n, m):
    return ((n + m - 1) // m) * m


def embbag_linear_kernel(
    idx_ref,    # (N,)      int32, SMEM   flat indices
    off_ref,    # (B+1,)    int32, SMEM   bag offsets, off_ref[B] == N
    emb_ref,    # (V, E)    f32,   VMEM   full embedding table
    w_ref,      # (E, 128)  f32,   VMEM   W^T lane-padded
    b_ref,      # (1, 128)  f32,   VMEM   bias lane-padded
    o_ref,      # (B_pad, 128) f32, VMEM  lane-dense output slab
):
    n_bags = off_ref.shape[0] - 1
    emb_dim = emb_ref.shape[1]
    b_pad = o_ref.shape[0]

    def bag_sum(b):
        start = off_ref[b]
        count = off_ref[b + 1] - start

        def body(j, acc):
            # Gather one embedding row from the VMEM-resident table.
            row = emb_ref[pl.ds(idx_ref[start + j], 1), :]          # (1, E)
            return acc + row.astype(jnp.float32)

        # Empty bag -> zeros (PyTorch sum-mode semantics); bias added below.
        return lax.fori_loop(0, count, body,
                             jnp.zeros((1, emb_dim), jnp.float32))

    rows = [bag_sum(b) for b in range(n_bags)]
    rows += [jnp.zeros((1, emb_dim), jnp.float32)] * (b_pad - n_bags)
    bags = jnp.concatenate(rows, axis=0)                            # (B_pad, E)

    # Single MXU matmul for all bags + lane-padded bias; one unmasked store.
    o_ref[...] = (
        jnp.dot(bags, w_ref[...], preferred_element_type=jnp.float32)
        + b_ref[...]
    )


def model_forward(x, offsets, emb_weight, lin_weight, lin_bias):
    """x: (N,) int indices; offsets: (B,) int bag starts (offsets[0] == 0)."""
    N = x.shape[0]
    B = offsets.shape[0]
    V, E = emb_weight.shape
    OUT = lin_weight.shape[0]
    assert OUT <= LANES

    B_pad = max(SUBLANES, _round_up(B, SUBLANES))

    idx = x.astype(jnp.int32)                                       # (N,)
    off_ext = jnp.concatenate(
        [offsets.astype(jnp.int32), jnp.array([N], dtype=jnp.int32)]
    )                                                               # (B+1,)

    # Lane-pad the Linear so the matmul result and output store are full-width.
    w_pad = jnp.zeros((E, LANES), jnp.float32).at[:, :OUT].set(
        lin_weight.T.astype(jnp.float32)
    )
    b_pad = jnp.zeros((1, LANES), jnp.float32).at[:, :OUT].set(
        lin_bias.astype(jnp.float32).reshape(1, OUT)
    )

    smem = pltpu.MemorySpace.SMEM
    vmem = pltpu.MemorySpace.VMEM

    out = pl.pallas_call(
        embbag_linear_kernel,
        out_shape=jax.ShapeDtypeStruct((B_pad, LANES), jnp.float32),
        in_specs=[
            pl.BlockSpec(memory_space=smem),   # idx
            pl.BlockSpec(memory_space=smem),   # off_ext
            pl.BlockSpec(memory_space=vmem),   # embedding table (whole)
            pl.BlockSpec(memory_space=vmem),   # padded W^T
            pl.BlockSpec(memory_space=vmem),   # padded bias row
        ],
        out_specs=pl.BlockSpec(memory_space=vmem),
    )(idx, off_ext, emb_weight.astype(jnp.float32), w_pad, b_pad)

    # Slice the lane-dense slab back to the PyTorch (B, OUT) layout.
    return out[:B, :OUT]


def reference_forward(x, offsets, emb_weight, lin_weight, lin_bias):
    N = x.shape[0]
    ends = jnp.concatenate([offsets[1:], jnp.array([N], dtype=offsets.dtype)])
    gathered = emb_weight[x]                                        # (N, E)
    pos = jnp.arange(N)[None, :]
    seg = ((pos >= offsets[:, None]) & (pos < ends[:, None])).astype(jnp.float32)
    bags = seg @ gathered                                           # (B, E)
    return bags @ lin_weight.T + lin_bias


if __name__ == "__main__":
    key = jax.random.PRNGKey(0)
    k_emb, k_w, k_b, k_x = jax.random.split(key, 4)

    V, E, OUT = 10, 3, 1          # EmbeddingBag(10, 3), Linear(3, 1)
    N, B = 8, 3                   # 8 indices split into 3 bags

    emb_weight = jax.random.normal(k_emb, (V, E), dtype=jnp.float32)
    lin_weight = jax.random.normal(k_w, (OUT, E), dtype=jnp.float32) * 0.5
    lin_bias = jax.random.normal(k_b, (OUT,), dtype=jnp.float32) * 0.1

    x = jax.random.randint(k_x, (N,), 0, V, dtype=jnp.int32)
    offsets = jnp.array([0, 3, 5], dtype=jnp.int32)

    out = model_forward(x, offsets, emb_weight, lin_weight, lin_bias)
    out = jax.block_until_ready(out)

    ref = reference_forward(x, offsets, emb_weight, lin_weight, lin_bias)
    assert out.shape == (B, OUT), out.shape
    assert jnp.allclose(out, ref, atol=1e-5, rtol=1e-5), (out, ref)

    print("KERNEL_OK")
</pallas_src>

<mosaic_0001>
module attributes {stable_mosaic.version = 11 : i64} {
  func.func @embbag_linear_kernel(%arg0: memref<8xi32, #tpu.memory_space<smem>>, %arg1: memref<4xi32, #tpu.memory_space<smem>>, %arg2: memref<10x3xf32, #tpu.memory_space<vmem>>, %arg3: memref<3x128xf32, #tpu.memory_space<vmem>>, %arg4: memref<1x128xf32, #tpu.memory_space<vmem>>, %arg5: memref<8x128xf32, #tpu.memory_space<vmem>>) attributes {dimension_semantics = [], scalar_prefetch = 0 : i64, scratch_operands = 0 : i64, tpu.core_type = #tpu.core_type<tc>} {
    %c0 = arith.constant 0 : index
    %0 = memref.load %arg1[%c0] : memref<4xi32, #tpu.memory_space<smem>>
    %c1 = arith.constant 1 : index
    %1 = memref.load %arg1[%c1] : memref<4xi32, #tpu.memory_space<smem>>
    %2 = arith.subi %1, %0 : i32
    %cst = arith.constant 0.000000e+00 : f32
    %3 = vector.broadcast %cst : f32 to vector<1x3xf32>
    %c0_i32 = arith.constant 0 : i32
    %4 = arith.subi %2, %c0_i32 : i32
    %5 = arith.addi %c0_i32, %4 : i32
    %c1_i32 = arith.constant 1 : i32
    %6 = scf.for %arg6 = %c0_i32 to %5 step %c1_i32 iter_args(%arg7 = %3) -> (vector<1x3xf32>)  : i32 {
      %29 = arith.addi %0, %arg6 : i32
      %30 = arith.index_cast %29 : i32 to index
      %31 = memref.load %arg0[%30] : memref<8xi32, #tpu.memory_space<smem>>
      %32 = arith.index_cast %31 : i32 to index
      %c0_16 = arith.constant 0 : index
      %33 = vector.load %arg2[%32, %c0_16] : memref<10x3xf32, #tpu.memory_space<vmem>>, vector<1x3xf32>
      %34 = arith.addf %arg7, %33 : vector<1x3xf32>
      scf.yield %34 : vector<1x3xf32>
    }
    %c1_0 = arith.constant 1 : index
    %7 = memref.load %arg1[%c1_0] : memref<4xi32, #tpu.memory_space<smem>>
    %c2 = arith.constant 2 : index
    %8 = memref.load %arg1[%c2] : memref<4xi32, #tpu.memory_space<smem>>
    %9 = arith.subi %8, %7 : i32
    %cst_1 = arith.constant 0.000000e+00 : f32
    %10 = vector.broadcast %cst_1 : f32 to vector<1x3xf32>
    %c0_i32_2 = arith.constant 0 : i32
    %11 = arith.subi %9, %c0_i32_2 : i32
    %12 = arith.addi %c0_i32_2, %11 : i32
    %c1_i32_3 = arith.constant 1 : i32
    %13 = scf.for %arg6 = %c0_i32_2 to %12 step %c1_i32_3 iter_args(%arg7 = %10) -> (vector<1x3xf32>)  : i32 {
      %29 = arith.addi %7, %arg6 : i32
      %30 = arith.index_cast %29 : i32 to index
      %31 = memref.load %arg0[%30] : memref<8xi32, #tpu.memory_space<smem>>
      %32 = arith.index_cast %31 : i32 to index
      %c0_16 = arith.constant 0 : index
      %33 = vector.load %arg2[%32, %c0_16] : memref<10x3xf32, #tpu.memory_space<vmem>>, vector<1x3xf32>
      %34 = arith.addf %arg7, %33 : vector<1x3xf32>
      scf.yield %34 : vector<1x3xf32>
    }
    %c2_4 = arith.constant 2 : index
    %14 = memref.load %arg1[%c2_4] : memref<4xi32, #tpu.memory_space<smem>>
    %c3 = arith.constant 3 : index
    %15 = memref.load %arg1[%c3] : memref<4xi32, #tpu.memory_space<smem>>
    %16 = arith.subi %15, %14 : i32
    %cst_5 = arith.constant 0.000000e+00 : f32
    %17 = vector.broadcast %cst_5 : f32 to vector<1x3xf32>
    %c0_i32_6 = arith.constant 0 : i32
    %18 = arith.subi %16, %c0_i32_6 : i32
    %19 = arith.addi %c0_i32_6, %18 : i32
    %c1_i32_7 = arith.constant 1 : i32
    %20 = scf.for %arg6 = %c0_i32_6 to %19 step %c1_i32_7 iter_args(%arg7 = %17) -> (vector<1x3xf32>)  : i32 {
      %29 = arith.addi %14, %arg6 : i32
      %30 = arith.index_cast %29 : i32 to index
      %31 = memref.load %arg0[%30] : memref<8xi32, #tpu.memory_space<smem>>
      %32 = arith.index_cast %31 : i32 to index
      %c0_16 = arith.constant 0 : index
      %33 = vector.load %arg2[%32, %c0_16] : memref<10x3xf32, #tpu.memory_space<vmem>>, vector<1x3xf32>
      %34 = arith.addf %arg7, %33 : vector<1x3xf32>
      scf.yield %34 : vector<1x3xf32>
    }
    %cst_8 = arith.constant 0.000000e+00 : f32
    %21 = vector.broadcast %cst_8 : f32 to vector<1x3xf32>
    %22 = tpu.concatenate %6, %13, %20, %21, %21, %21, %21, %21 in 0 : vector<1x3xf32>, vector<1x3xf32>, vector<1x3xf32>, vector<1x3xf32>, vector<1x3xf32>, vector<1x3xf32>, vector<1x3xf32>, vector<1x3xf32> -> vector<8x3xf32>
    %c0_9 = arith.constant 0 : index
    %c0_10 = arith.constant 0 : index
    %23 = vector.load %arg3[%c0_9, %c0_10] : memref<3x128xf32, #tpu.memory_space<vmem>>, vector<3x128xf32>
    %cst_11 = arith.constant dense<0.000000e+00> : vector<8x128xf32>
    %24 = tpu.matmul %22, %23, %cst_11 {dimension_numbers = #tpu.dot_dimension_numbers<[1], [0], [0], [1], [0, 0, 1, 1], [], []>} : vector<8x3xf32>, vector<3x128xf32>, vector<8x128xf32> -> vector<8x128xf32>
    %c0_12 = arith.constant 0 : index
    %c0_13 = arith.constant 0 : index
    %25 = vector.load %arg4[%c0_12, %c0_13] : memref<1x128xf32, #tpu.memory_space<vmem>>, vector<1x128xf32>
    %26 = vector.broadcast %25 : vector<1x128xf32> to vector<8x128xf32>
    %27 = arith.addf %24, %26 : vector<8x128xf32>
    %c0_14 = arith.constant 0 : index
    %c0_15 = arith.constant 0 : index
    %28 = vector.load %arg5[%c0_14, %c0_15] : memref<8x128xf32, #tpu.memory_space<vmem>>, vector<8x128xf32>
    tpu.vector_store %arg5[%c0_14, %c0_15], %27 {strides = array<i32>} : memref<8x128xf32, #tpu.memory_space<vmem>>, vector<8x128xf32>,
    return
  }
}

</mosaic_0001>

<llo_original>
// kernel: tpu_custom_call.1
$region0: #{tpu_custom_call.1}
  #allocation0 [shape = 'u32[]', space=smem, size = 0x4, offset = 0x4, fixed_abs, tag = 'smem constant byte address 0x4 - core index']
  #allocation1 [shape = 'u32[144,128]{1,0:T(1,128)}', space=vmem, size = 0x12000, scoped, tag = 'internal scratch']
  %s0 = inlined_call_operand.vmem [shape: s32[8], index: 0, kind: input, shape index: {}]
  %s1 = inlined_call_operand.vmem [shape: s32[4], index: 1, kind: input, shape index: {}]
  %s2 = inlined_call_operand.vmem [shape: f32[10,3], index: 2, kind: input, shape index: {}]
  %s3 = inlined_call_operand.vmem [shape: f32[3,128], index: 3, kind: input, shape index: {}]
  %s4 = inlined_call_operand.vmem [shape: f32[1,128], index: 4, kind: input, shape index: {}]
  %s5 = inlined_call_operand.hbm [shape: f32[8,128], index: 5, kind: output, shape index: {}]
  %s6 = sld [smem:[#allocation0]]
  $region59: #{tpu_custom_call.1} parent=0
    _
  %s8 = ssub.s32 1, %s6
  %s9 = scalar_select 0, %s8, %s6
  $region1: #{tpu_custom_call.1} parent=0
    #allocation2 [shape = 'u8[512]{0}', space=smem, size = 0x200, scoped, tag = 'input window, operand 0, single buffered']
    #allocation3 [shape = 's32[1]{0}', space=sflag, size = 0x4, scoped, tag = 'scoped memory for tpu_custom_call.1']
    #allocation4 [shape = 's32[1]{0}', space=sflag, size = 0x4, scoped, tag = 'scoped memory for tpu_custom_call.1']
    #allocation5 [shape = 'u8[512]{0}', space=smem, size = 0x200, scoped, tag = 'input window, operand 1, single buffered']
    #allocation6 [shape = 's32[1]{0}', space=sflag, size = 0x4, scoped, tag = 'scoped memory for tpu_custom_call.1']
    #allocation7 [shape = 'u8[4096]{0}', space=vmem, size = 0x1000, scoped, tag = 'output window, operand 0, single buffered']
    %10 = vsyncpa [#allocation4], 0
    %11 = vsyncpa [#allocation6], 0
    %12 = vsyncpa [#allocation3], 0
    // Predicated region
    $region2: #{tpu_custom_call.1} parent=1 // pred_check
      _
    $region3: #{tpu_custom_call.1} parent=1 // pred_check_branch
      %14 = sbr.rel (0) target = $region5
    $region4: #{tpu_custom_call.1} parent=1 // pred_region
      %s16 = ssub.s32 16, 16
      %17 = vsyncadd [#allocation4], %s16
      %s19 = sshll.u32 %s0, 4
      %s20 = int_to_ptr.vmem [resolvable:$true] %s19
      %22 = dma.vmem_to_smem %s20, 16, [#allocation2], [#allocation4]
    $region5: #{tpu_custom_call.1} parent=1 // pred_fallthru
      _
    // Predicated region
    $region6: #{tpu_custom_call.1} parent=1 // pred_check
      _
    $region7: #{tpu_custom_call.1} parent=1 // pred_check_branch
      %24 = sbr.rel (0) target = $region9
    $region8: #{tpu_custom_call.1} parent=1 // pred_region
      %s26 = ssub.s32 16, 16
      %27 = vsyncadd [#allocation6], %s26
      %s29 = sshll.u32 %s1, 4
      %s30 = int_to_ptr.vmem [resolvable:$true] %s29
      %32 = dma.vmem_to_smem %s30, 16, [#allocation5], [#allocation6]
    $region9: #{tpu_custom_call.1} parent=1 // pred_fallthru
      _
    // Predicated region
    $region10: #{tpu_custom_call.1} parent=1 // pred_check
      _
    $region11: #{tpu_custom_call.1} parent=1 // pred_check_branch
      %34 = sbr.rel (0) target = $region13
    $region12: #{tpu_custom_call.1} parent=1 // pred_region
      _
    $region13: #{tpu_custom_call.1} parent=1 // pred_fallthru
      _
    // Predicated region
    $region14: #{tpu_custom_call.1} parent=1 // pred_check
      _
    $region15: #{tpu_custom_call.1} parent=1 // pred_check_branch
      %36 = sbr.rel (0) target = $region17
    $region16: #{tpu_custom_call.1} parent=1 // pred_region
      _
    $region17: #{tpu_custom_call.1} parent=1 // pred_fallthru
      _
    // Predicated region
    $region18: #{tpu_custom_call.1} parent=1 // pred_check
      _
    $region19: #{tpu_custom_call.1} parent=1 // pred_check_branch
      %38 = sbr.rel (0) target = $region21
    $region20: #{tpu_custom_call.1} parent=1 // pred_region
      _
    $region21: #{tpu_custom_call.1} parent=1 // pred_fallthru
      _
    // Predicated region
    $region22: #{tpu_custom_call.1} parent=1 // pred_check
      _
    $region23: #{tpu_custom_call.1} parent=1 // pred_check_branch
      %40 = sbr.rel (0) target = $region25
    $region24: #{tpu_custom_call.1} parent=1 // pred_region
      %41 = dma.done [#allocation4], 16
    $region25: #{tpu_custom_call.1} parent=1 // pred_fallthru
      _
    // Predicated region
    $region26: #{tpu_custom_call.1} parent=1 // pred_check
      _
    $region27: #{tpu_custom_call.1} parent=1 // pred_check_branch
      %43 = sbr.rel (0) target = $region29
    $region28: #{tpu_custom_call.1} parent=1 // pred_region
      %44 = dma.done [#allocation6], 16
    $region29: #{tpu_custom_call.1} parent=1 // pred_fallthru
      _
    %45 = sfence
    %s46 = sld [smem:[#allocation5]]
    %s47 = sld [smem:[#allocation5 + $0x1]]
    %s48 = ssub.s32 %s47, %s46
    // While loop
    $region30: #{tpu_custom_call.1} parent=1 // loop_pre_header
      _
    $region31: #{tpu_custom_call.1} parent=1 // loop_header
      %s50 = sphi 0, %s52
      %p51 = scmp.ge.s32.totalorder %s50, %s48
      %v55 = vphi 0.0, %v60
    $region32: #{tpu_custom_call.1} parent=1 // loop_header_branch
      %54 = sbr.rel (%p51) target = $region36
    $region33: #{tpu_custom_call.1} parent=1 // loop_body
      %s56 = sadd.s32 %s46, %s50
      %s57 = sld [smem:[#allocation2 + %s56]]
      %s58 = scalar_lea.vmem %s2, %s57
      %v59 = vld [vmem:[%s58] sm:$0x1]
      %v60 = vadd.f32 %v55, %v59
    $region34: #{tpu_custom_call.1} parent=1 // loop_footer
      %s52 = sadd.s32 %s50, 1
    $region35: #{tpu_custom_call.1} parent=1 // loop_footer_branch
      %49 = sbr.rel target = $region31
    $region36: #{tpu_custom_call.1} parent=1 // loop_exit
      _
    %s61 = sld [smem:[#allocation5 + $0x2]]
    %s62 = ssub.s32 %s61, %s47
    // While loop
    $region37: #{tpu_custom_call.1} parent=1 // loop_pre_header
      _
    $region38: #{tpu_custom_call.1} parent=1 // loop_header
      %s64 = sphi 0, %s66
      %p65 = scmp.ge.s32.totalorder %s64, %s62
      %v69 = vphi 0.0, %v74
    $region39: #{tpu_custom_call.1} parent=1 // loop_header_branch
      %68 = sbr.rel (%p65) target = $region43
    $region40: #{tpu_custom_call.1} parent=1 // loop_body
      %s70 = sadd.s32 %s47, %s64
      %s71 = sld [smem:[#allocation2 + %s70]]
      %s72 = scalar_lea.vmem %s2, %s71
      %v73 = vld [vmem:[%s72] sm:$0x1]
      %v74 = vadd.f32 %v69, %v73
    $region41: #{tpu_custom_call.1} parent=1 // loop_footer
      %s66 = sadd.s32 %s64, 1
    $region42: #{tpu_custom_call.1} parent=1 // loop_footer_branch
      %63 = sbr.rel target = $region38
    $region43: #{tpu_custom_call.1} parent=1 // loop_exit
      _
    %s75 = sld [smem:[#allocation5 + $0x3]]
    %s76 = ssub.s32 %s75, %s61
    // While loop
    $region44: #{tpu_custom_call.1} parent=1 // loop_pre_header
      _
    $region45: #{tpu_custom_call.1} parent=1 // loop_header
      %s78 = sphi 0, %s80
      %p79 = scmp.ge.s32.totalorder %s78, %s76
      %v83 = vphi 0.0, %v88
    $region46: #{tpu_custom_call.1} parent=1 // loop_header_branch
      %82 = sbr.rel (%p79) target = $region50
    $region47: #{tpu_custom_call.1} parent=1 // loop_body
      %s84 = sadd.s32 %s61, %s78
      %s85 = sld [smem:[#allocation2 + %s84]]
      %s86 = scalar_lea.vmem %s2, %s85
      %v87 = vld [vmem:[%s86] sm:$0x1]
      %v88 = vadd.f32 %v83, %v87
    $region48: #{tpu_custom_call.1} parent=1 // loop_footer
      %s80 = sadd.s32 %s78, 1
    $region49: #{tpu_custom_call.1} parent=1 // loop_footer_branch
      %77 = sbr.rel target = $region45
    $region50: #{tpu_custom_call.1} parent=1 // loop_exit
      _
    %v90 = vrot.slane %v69, 7
    %v93 = vrot.slane %v83, 6
    %vm95 = vcmask 1040384
    %v96 = vsel %vm95, %v55, %v90
    %vm97 = vcmask 1041408
    %v98 = vsel %vm97, %v96, %v93
    %vm99 = vcmask 1042432
    %v100 = vsel %vm99, %v98, 0.0
    %vm101 = vcmask 1043456
    %v102 = vsel %vm101, %v100, 0.0
    %vm103 = vcmask 1044480
    %v104 = vsel %vm103, %v102, 0.0
    %vm105 = vcmask 1045504
    %v106 = vsel %vm105, %v104, 0.0
    %vm107 = vcmask 1046528
    %v108 = vsel %vm107, %v106, 0.0
    %v109 = vld [vmem:[%s3] sm:$0x7]
    %v110 = vld [vmem:[%s4] sm:$0x1]
    %v112 = vlaneseq
    %v113 = vshrl.u32 %v112, 7
    %v114 = vsub.s32 0, %v113
    %v115 = vrot.slane %v110, %v114
    %vm117 = vcmask 23552
    %v119 = vsel %vm117, %v108, 0
    %v122 = vsel %vm99, %v109, 0
    %124 = vmatprep.subr.mxu0 0.0
    %125 = vmatpush1.msra.mxu0 %v122
    %126 = vmatprep.subr.mxu0 0.0
    %127 = vmatpush1.msra.mxu0 0.0
    %128 = vmatprep.subr.mxu0 0.0
    %129 = vmatpush1.msra.mxu0 0.0
    %130 = vmatprep.subr.mxu0 0.0
    %131 = vmatpush1.msra.mxu0 0.0
    %132 = vmatprep.subr.mxu0 0.0
    %133 = vmatpush1.msra.mxu0 0.0
    %134 = vmatprep.subr.mxu0 0.0
    %135 = vmatpush1.msra.mxu0 0.0
    %136 = vmatprep.subr.mxu0 0.0
    %137 = vmatpush1.msra.mxu0 0.0
    %138 = vmatprep.subr.mxu0 0.0
    %139 = vmatpush1.msra.mxu0 0.0
    %140 = vmatprep.subr.mxu0 0.0
    %141 = vmatpush1.msra.mxu0 0.0
    %142 = vmatprep.subr.mxu0 0.0
    %143 = vmatpush1.msra.mxu0 0.0
    %144 = vmatprep.subr.mxu0 0.0
    %145 = vmatpush1.msra.mxu0 0.0
    %146 = vmatprep.subr.mxu0 0.0
    %147 = vmatpush1.msra.mxu0 0.0
    %148 = vmatprep.subr.mxu0 0.0
    %149 = vmatpush1.msra.mxu0 0.0
    %150 = vmatprep.subr.mxu0 0.0
    %151 = vmatpush1.msra.mxu0 0.0
    %152 = vmatprep.subr.mxu0 0.0
    %153 = vmatpush1.msra.mxu0 0.0
    %154 = vmatprep.subr.mxu0 0.0
    %155 = vmatpush1.msra.mxu0 0.0
    %156 = vmatprep.subr.mxu0 0.0
    %157 = vmatpush1.msra.mxu0 0.0
    %158 = vmatprep.subr.mxu0 0.0
    %159 = vmatpush1.msra.mxu0 0.0
    %160 = vmatprep.subr.mxu0 0.0
    %161 = vmatpush1.msra.mxu0 0.0
    %162 = vmatprep.subr.mxu0 0.0
    %163 = vmatpush1.msra.mxu0 0.0
    %164 = vmatprep.subr.mxu0 0.0
    %165 = vmatpush1.msra.mxu0 0.0
    %166 = vmatprep.subr.mxu0 0.0
    %167 = vmatpush1.msra.mxu0 0.0
    %168 = vmatprep.subr.mxu0 0.0
    %169 = vmatpush1.msra.mxu0 0.0
    %170 = vmatprep.subr.mxu0 0.0
    %171 = vmatpush1.msra.mxu0 0.0
    %172 = vmatprep.subr.mxu0 0.0
    %173 = vmatpush1.msra.mxu0 0.0
    %174 = vmatprep.subr.mxu0 0.0
    %175 = vmatpush1.msra.mxu0 0.0
    %176 = vmatprep.subr.mxu0 0.0
    %177 = vmatpush1.msra.mxu0 0.0
    %178 = vmatprep.subr.mxu0 0.0
    %179 = vmatpush1.msra.mxu0 0.0
    %180 = vmatprep.subr.mxu0 0.0
    %181 = vmatpush1.msra.mxu0 0.0
    %182 = vmatprep.subr.mxu0 0.0
    %183 = vmatpush1.msra.mxu0 0.0
    %184 = vmatprep.subr.mxu0 0.0
    %185 = vmatpush1.msra.mxu0 0.0
    %186 = vmatprep.subr.mxu0 0.0
    %187 = vmatpush1.msra.mxu0 0.0
    %188 = vmatprep.mubr.f32.mxu0 0.0
    %189 = vmatmul.mubr.f32.gmra.mrb[0].mxu0 %v119
    %v190 = vpop.f32.mrb[0].mxu0
    %v191 = vadd.f32 %v115, %v190
    %v192 = vpop.f32.mrb[0].mxu0
    %193 = vdwg.mxu0
    %194 = vst [vmem:[#allocation7] sm:$0xff] %v191
    // Predicated region
    $region51: #{tpu_custom_call.1} parent=1 // pred_check
      _
    $region52: #{tpu_custom_call.1} parent=1 // pred_check_branch
      %196 = sbr.rel (0) target = $region54
    $region53: #{tpu_custom_call.1} parent=1 // pred_region
      %s198 = ssub.s32 128, 128
      %199 = vsyncadd [#allocation3], %s198
      %s201 = sshll.u32 [#allocation7], 4
      %s202 = int_to_ptr.vmem [resolvable:$true] %s201
      %204 = dma.vmem_to_hbm [thread:$0]  %s202, 128, %s5, [#allocation3]
    $region54: #{tpu_custom_call.1} parent=1 // pred_fallthru
      _
    // Predicated region
    $region55: #{tpu_custom_call.1} parent=1 // pred_check
      _
    $region56: #{tpu_custom_call.1} parent=1 // pred_check_branch
      %206 = sbr.rel (0) target = $region58
    $region57: #{tpu_custom_call.1} parent=1 // pred_region
      %207 = dma.done [#allocation3], 128
    $region58: #{tpu_custom_call.1} parent=1 // pred_fallthru
      _
    %208 = vsyncpa [#allocation3], 1
    %209 = vsyncpa [#allocation4], 1
    %210 = vsyncpa [#allocation6], 1

</llo_original>
